<compile_context>
chip_gen: v5e
topology: v5e:2x2
jax: 0.10.0
libtpu: 0.0.40
codegen_flags: <defaults>
</compile_context>

<pallas_src>
import functools

import jax
import jax.numpy as jnp
import numpy as np
from jax.experimental import pallas as pl
from jax.experimental.pallas import tpu as pltpu

LANE = 128  # TPU lane width: all matmul-output feature dims are padded to this.


# ------------------------------ param prep ------------------------------------
def _round_up(n, m):
    return ((n + m - 1) // m) * m


def _pad2(a, rows, cols):
    return jnp.pad(a, ((0, rows - a.shape[0]), (0, cols - a.shape[1])))


def prepare_params(raw):
    """Zero-pad weights ONCE so every matmul output is lane-dense (mult. of 128).

    Zero-padded rows/columns contribute exactly zero, so the real columns of
    every output are unchanged; the wrapper slices outputs back to logical size.
    """
    cat = raw["w_enc"].shape[1]
    k_way = raw["w_sp"].shape[1]
    dp = _round_up(cat, LANE)
    kp = _round_up(k_way, LANE)
    return dict(
        w_enc=_pad2(raw["w_enc"], raw["w_enc"].shape[0], dp),
        b_enc=_pad2(raw["b_enc"], 1, dp),
        w_sp=_pad2(raw["w_sp"], dp, kp),
        b_sp=_pad2(raw["b_sp"], 1, kp),
        w_kg=_pad2(raw["w_kg"], raw["w_kg"].shape[0], dp),
        b_kg=_pad2(raw["b_kg"], 1, dp),
        w1=_pad2(raw["w1"], dp, kp),
        b1=_pad2(raw["b1"], 1, kp),
        d=cat, k=k_way,
    )


# ------------------------------ fused kernel ----------------------------------
def _fskg_fused_kernel(idx_ref, x_ref, we_ref, be_ref, ws_ref, bs_ref,
                       desc_ref, wkg_ref, bkg_ref, w1_ref, b1_ref,
                       comb_ref, logits_ref, sp_ref, att_ref, corr_ref,
                       acc_ref, *, lamda):
    kk = pl.program_id(0)

    # ---- image-encoder matmul, contraction (flat_dim) axis tiled over the grid
    @pl.when(kk == 0)
    def _():
        acc_ref[...] = jnp.zeros_like(acc_ref)

    acc_ref[...] += jnp.dot(x_ref[...].astype(jnp.bfloat16),
                            we_ref[...].astype(jnp.bfloat16),
                            preferred_element_type=jnp.float32)

    # ---- epilogue: runs once; all intermediates stay in VMEM/vregs ------------
    @pl.when(kk == pl.num_programs(0) - 1)
    def _():
        feat = acc_ref[...] + be_ref[...]                 # (B, Dp) "att_features"
        att_ref[...] = feat

        # sp head (lane-dense padded output)
        sp_ref[...] = jnp.dot(feat.astype(jnp.bfloat16),
                              ws_ref[...].astype(jnp.bfloat16),
                              preferred_element_type=jnp.float32) + bs_ref[...]

        # norm=True: per-row L2 normalization (padded columns are exactly zero)
        inv = jax.lax.rsqrt(jnp.sum(feat * feat, axis=-1, keepdims=True) + 1e-12)
        img_f = feat * inv

        # KG path, gather-then-encode: one-hot(B,N) @ desc(N,emb) on the MXU
        # selects the B needed description rows (out-of-range index -> zero row,
        # never an out-of-bounds VMEM read), then one (B,emb)@(emb,Dp) encode.
        b = idx_ref.shape[0]
        n_nodes = desc_ref.shape[0]
        onehot = (jax.lax.broadcasted_iota(jnp.int32, (b, n_nodes), 1)
                  == idx_ref[...]).astype(jnp.float32)
        sel = jnp.dot(onehot, desc_ref[...], preferred_element_type=jnp.float32)
        corr = jnp.dot(sel.astype(jnp.bfloat16),
                       wkg_ref[...].astype(jnp.bfloat16),
                       preferred_element_type=jnp.float32) + bkg_ref[...]
        corr_ref[...] = corr                               # single store

        combined = img_f + lamda * corr                    # reuse register value
        comb_ref[...] = combined

        # fc1 head (lane-dense padded output)
        logits_ref[...] = jnp.dot(combined.astype(jnp.bfloat16),
                                  w1_ref[...].astype(jnp.bfloat16),
                                  preferred_element_type=jnp.float32) + b1_ref[...]


# ------------------------------- forward wrapper -------------------------------
def _pick_k_tile(flat_dim):
    for tk in (512, 1024, 256):
        if flat_dim % tk == 0:
            return tk
    return flat_dim  # full-extent block (always legal)


def fskg_forward(images, desc_embeddings, imgLabels_to_nodeIndexs, params, lamda):
    b = images.shape[0]
    x = images.reshape(b, -1).astype(jnp.float32)          # NCHW -> (B, C*H*W)
    flat = x.shape[1]
    tk = _pick_k_tile(flat)
    dp = params["w_enc"].shape[1]
    kp = params["w_sp"].shape[1]
    n_nodes, emb = desc_embeddings.shape
    idx2 = imgLabels_to_nodeIndexs.astype(jnp.int32).reshape(b, 1)

    const = lambda kk: (0, 0)
    outs = pl.pallas_call(
        functools.partial(_fskg_fused_kernel, lamda=float(lamda)),
        out_shape=(jax.ShapeDtypeStruct((b, dp), jnp.float32),   # combined
                   jax.ShapeDtypeStruct((b, kp), jnp.float32),   # fc1 logits
                   jax.ShapeDtypeStruct((b, kp), jnp.float32),   # sp_outputs
                   jax.ShapeDtypeStruct((b, dp), jnp.float32),   # att_features
                   jax.ShapeDtypeStruct((b, dp), jnp.float32)),  # corr_features
        grid_spec=pltpu.PrefetchScalarGridSpec(
            num_scalar_prefetch=0,
            grid=(flat // tk,),
            in_specs=[
                pl.BlockSpec((b, 1), const),                     # node indices
                pl.BlockSpec((b, tk), lambda kk: (0, kk)),       # x_flat K-tile
                pl.BlockSpec((tk, dp), lambda kk: (kk, 0)),      # w_enc K-tile
                pl.BlockSpec((1, dp), const),                    # b_enc
                pl.BlockSpec((dp, kp), const),                   # w_sp
                pl.BlockSpec((1, kp), const),                    # b_sp
                pl.BlockSpec((n_nodes, emb), const),             # desc embeddings
                pl.BlockSpec((emb, dp), const),                  # w_kg
                pl.BlockSpec((1, dp), const),                    # b_kg
                pl.BlockSpec((dp, kp), const),                   # w1
                pl.BlockSpec((1, kp), const),                    # b1
            ],
            out_specs=(pl.BlockSpec((b, dp), const),
                       pl.BlockSpec((b, kp), const),
                       pl.BlockSpec((b, kp), const),
                       pl.BlockSpec((b, dp), const),
                       pl.BlockSpec((b, dp), const)),
            scratch_shapes=[pltpu.VMEM((b, dp), jnp.float32)]),
        compiler_params=pltpu.CompilerParams(
            dimension_semantics=("arbitrary",)),
    )(idx2, x, params["w_enc"], params["b_enc"], params["w_sp"], params["b_sp"],
      desc_embeddings, params["w_kg"], params["b_kg"], params["w1"], params["b1"])

    comb_p, logits_p, sp_p, att_p, corr_p = outs
    d, k = params["d"], params["k"]
    return (comb_p[:, :d], logits_p[:, :k], sp_p[:, :k],
            att_p[:, :d], corr_p[:, :d])


# ------------------------------ pure-JAX reference ------------------------------
def fskg_reference(images, desc, idx, raw, lamda):
    hi = jax.lax.Precision.HIGHEST
    x_flat = images.reshape(images.shape[0], -1)
    feat = jnp.dot(x_flat, raw["w_enc"], precision=hi) + raw["b_enc"]
    att = feat
    sp = jnp.dot(feat, raw["w_sp"], precision=hi) + raw["b_sp"]
    img_f = feat / jnp.sqrt(jnp.sum(feat * feat, axis=-1, keepdims=True) + 1e-12)
    kg = jnp.dot(desc, raw["w_kg"], precision=hi) + raw["b_kg"]
    corr = kg[idx, :]
    comb = img_f + lamda * corr
    logits = jnp.dot(comb, raw["w1"], precision=hi) + raw["b1"]
    return comb, logits, sp, att, corr


# ----------------------------------- main ---------------------------------------
if __name__ == "__main__":
    B, C, H, W = 2, 4, 16, 16
    cat_feature = 32
    k_way = 4
    emb_dim = 32
    n_nodes = 16
    lamda = 0.5
    flat_dim = C * H * W

    key = jax.random.PRNGKey(0)
    ks = jax.random.split(key, 10)

    images = jax.random.normal(ks[0], (B, C, H, W), jnp.float32)
    desc_embeddings = jax.random.normal(ks[1], (n_nodes, emb_dim), jnp.float32)
    imgLabels_to_nodeIndexs = jnp.array([3, 7], dtype=jnp.int32)

    def init_lin(k, fan_in, fan_out):
        bound = 1.0 / np.sqrt(fan_in)
        kw, kb = jax.random.split(k)
        w = jax.random.uniform(kw, (fan_in, fan_out), jnp.float32, -bound, bound)
        b = jax.random.uniform(kb, (1, fan_out), jnp.float32, -bound, bound)
        return w, b

    w_enc, b_enc = init_lin(ks[2], flat_dim, cat_feature)     # synthetic img encoder
    w_sp, b_sp = init_lin(ks[3], cat_feature, k_way)          # synthetic sp head
    w_kg, b_kg = init_lin(ks[4], emb_dim, cat_feature)        # synthetic kg encoder
    w1, b1 = init_lin(ks[5], cat_feature, k_way)              # fc1 of FSKG

    raw_params = dict(w_enc=w_enc, b_enc=b_enc, w_sp=w_sp, b_sp=b_sp,
                      w_kg=w_kg, b_kg=b_kg, w1=w1, b1=b1)
    params = prepare_params(raw_params)                       # lane-dense padding, once

    outs = fskg_forward(images, desc_embeddings, imgLabels_to_nodeIndexs,
                        params, lamda)
    outs = jax.block_until_ready(outs)

    refs = fskg_reference(images, desc_embeddings, imgLabels_to_nodeIndexs,
                          raw_params, lamda)
    for o, r in zip(outs, refs):
        np.testing.assert_allclose(np.asarray(o), np.asarray(r),
                                   rtol=2e-2, atol=2e-2)

    print("KERNEL_OK")
</pallas_src>

<mosaic_0001>
module attributes {stable_mosaic.version = 11 : i64} {
  func.func @_fskg_fused_kernel(%arg0: i32, %arg1: memref<2x1xi32, #tpu.memory_space<vmem>>, %arg2: memref<2x512xf32, #tpu.memory_space<vmem>>, %arg3: memref<512x128xf32, #tpu.memory_space<vmem>>, %arg4: memref<1x128xf32, #tpu.memory_space<vmem>>, %arg5: memref<128x128xf32, #tpu.memory_space<vmem>>, %arg6: memref<1x128xf32, #tpu.memory_space<vmem>>, %arg7: memref<16x32xf32, #tpu.memory_space<vmem>>, %arg8: memref<32x128xf32, #tpu.memory_space<vmem>>, %arg9: memref<1x128xf32, #tpu.memory_space<vmem>>, %arg10: memref<128x128xf32, #tpu.memory_space<vmem>>, %arg11: memref<1x128xf32, #tpu.memory_space<vmem>>, %arg12: memref<2x128xf32, #tpu.memory_space<vmem>>, %arg13: memref<2x128xf32, #tpu.memory_space<vmem>>, %arg14: memref<2x128xf32, #tpu.memory_space<vmem>>, %arg15: memref<2x128xf32, #tpu.memory_space<vmem>>, %arg16: memref<2x128xf32, #tpu.memory_space<vmem>>, %arg17: memref<2x128xf32, #tpu.memory_space<vmem>>) attributes {dimension_semantics = [#tpu.dimension_semantics<arbitrary>], iteration_bounds = array<i64: 2>, scalar_prefetch = 0 : i64, scratch_operands = 1 : i64, tpu.core_type = #tpu.core_type<tc>, window_params = [{pipeline_mode = #tpu.pipeline_mode<synchronous>, transform_indices = @transform_0, window_bounds = array<i64: 2, 1>}, {transform_indices = @transform_1, window_bounds = array<i64: 2, 512>}, {transform_indices = @transform_2, window_bounds = array<i64: 512, 128>}, {pipeline_mode = #tpu.pipeline_mode<synchronous>, transform_indices = @transform_3, window_bounds = array<i64: 1, 128>}, {pipeline_mode = #tpu.pipeline_mode<synchronous>, transform_indices = @transform_4, window_bounds = array<i64: 128, 128>}, {pipeline_mode = #tpu.pipeline_mode<synchronous>, transform_indices = @transform_5, window_bounds = array<i64: 1, 128>}, {pipeline_mode = #tpu.pipeline_mode<synchronous>, transform_indices = @transform_6, window_bounds = array<i64: 16, 32>}, {pipeline_mode = #tpu.pipeline_mode<synchronous>, transform_indices = @transform_7, window_bounds = array<i64: 32, 128>}, {pipeline_mode = #tpu.pipeline_mode<synchronous>, transform_indices = @transform_8, window_bounds = array<i64: 1, 128>}, {pipeline_mode = #tpu.pipeline_mode<synchronous>, transform_indices = @transform_9, window_bounds = array<i64: 128, 128>}, {pipeline_mode = #tpu.pipeline_mode<synchronous>, transform_indices = @transform_10, window_bounds = array<i64: 1, 128>}, {pipeline_mode = #tpu.pipeline_mode<synchronous>, transform_indices = @transform_11, window_bounds = array<i64: 2, 128>}, {pipeline_mode = #tpu.pipeline_mode<synchronous>, transform_indices = @transform_12, window_bounds = array<i64: 2, 128>}, {pipeline_mode = #tpu.pipeline_mode<synchronous>, transform_indices = @transform_13, window_bounds = array<i64: 2, 128>}, {pipeline_mode = #tpu.pipeline_mode<synchronous>, transform_indices = @transform_14, window_bounds = array<i64: 2, 128>}, {pipeline_mode = #tpu.pipeline_mode<synchronous>, transform_indices = @transform_15, window_bounds = array<i64: 2, 128>}]} {
    %c0_i32 = arith.constant 0 : i32
    %0 = arith.cmpi eq, %arg0, %c0_i32 : i32
    %1 = arith.extui %0 : i1 to i32
    %c0_i32_0 = arith.constant 0 : i32
    %2 = arith.cmpi ne, %1, %c0_i32_0 : i32
    scf.if %2 {
      %cst_9 = arith.constant 0.000000e+00 : f32
      %14 = vector.broadcast %cst_9 : f32 to vector<2x128xf32>
      %c0_10 = arith.constant 0 : index
      %c0_11 = arith.constant 0 : index
      %15 = vector.load %arg17[%c0_10, %c0_11] : memref<2x128xf32, #tpu.memory_space<vmem>>, vector<2x128xf32>
      tpu.vector_store %arg17[%c0_10, %c0_11], %14 {strides = array<i32>} : memref<2x128xf32, #tpu.memory_space<vmem>>, vector<2x128xf32>,
    } else {
    }
    %c0 = arith.constant 0 : index
    %c0_1 = arith.constant 0 : index
    %3 = vector.load %arg17[%c0, %c0_1] : memref<2x128xf32, #tpu.memory_space<vmem>>, vector<2x128xf32>
    %c0_2 = arith.constant 0 : index
    %c0_3 = arith.constant 0 : index
    %4 = vector.load %arg2[%c0_2, %c0_3] : memref<2x512xf32, #tpu.memory_space<vmem>>, vector<2x512xf32>
    %5 = arith.truncf %4 : vector<2x512xf32> to vector<2x512xbf16>
    %c0_4 = arith.constant 0 : index
    %c0_5 = arith.constant 0 : index
    %6 = vector.load %arg3[%c0_4, %c0_5] : memref<512x128xf32, #tpu.memory_space<vmem>>, vector<512x128xf32>
    %7 = arith.truncf %6 : vector<512x128xf32> to vector<512x128xbf16>
    %cst = arith.constant dense<0.000000e+00> : vector<2x128xf32>
    %8 = tpu.matmul %5, %7, %cst {dimension_numbers = #tpu.dot_dimension_numbers<[1], [0], [0], [1], [0, 0, 1, 1], [], []>} : vector<2x512xbf16>, vector<512x128xbf16>, vector<2x128xf32> -> vector<2x128xf32>
    %9 = arith.addf %3, %8 : vector<2x128xf32>
    %c0_6 = arith.constant 0 : index
    %c0_7 = arith.constant 0 : index
    %10 = vector.load %arg17[%c0_6, %c0_7] : memref<2x128xf32, #tpu.memory_space<vmem>>, vector<2x128xf32>
    tpu.vector_store %arg17[%c0_6, %c0_7], %9 {strides = array<i32>} : memref<2x128xf32, #tpu.memory_space<vmem>>, vector<2x128xf32>,
    %c1_i32 = arith.constant 1 : i32
    %11 = arith.cmpi eq, %arg0, %c1_i32 : i32
    %12 = arith.extui %11 : i1 to i32
    %c0_i32_8 = arith.constant 0 : i32
    %13 = arith.cmpi ne, %12, %c0_i32_8 : i32
    scf.if %13 {
      %c0_9 = arith.constant 0 : index
      %c0_10 = arith.constant 0 : index
      %14 = vector.load %arg17[%c0_9, %c0_10] : memref<2x128xf32, #tpu.memory_space<vmem>>, vector<2x128xf32>
      %c0_11 = arith.constant 0 : index
      %c0_12 = arith.constant 0 : index
      %15 = vector.load %arg4[%c0_11, %c0_12] : memref<1x128xf32, #tpu.memory_space<vmem>>, vector<1x128xf32>
      %16 = vector.broadcast %15 : vector<1x128xf32> to vector<2x128xf32>
      %17 = arith.addf %14, %16 : vector<2x128xf32>
      %c0_13 = arith.constant 0 : index
      %c0_14 = arith.constant 0 : index
      %18 = vector.load %arg15[%c0_13, %c0_14] : memref<2x128xf32, #tpu.memory_space<vmem>>, vector<2x128xf32>
      tpu.vector_store %arg15[%c0_13, %c0_14], %17 {strides = array<i32>} : memref<2x128xf32, #tpu.memory_space<vmem>>, vector<2x128xf32>,
      %19 = arith.truncf %17 : vector<2x128xf32> to vector<2x128xbf16>
      %c0_15 = arith.constant 0 : index
      %c0_16 = arith.constant 0 : index
      %20 = vector.load %arg5[%c0_15, %c0_16] : memref<128x128xf32, #tpu.memory_space<vmem>>, vector<128x128xf32>
      %21 = arith.truncf %20 : vector<128x128xf32> to vector<128x128xbf16>
      %cst_17 = arith.constant dense<0.000000e+00> : vector<2x128xf32>
      %22 = tpu.matmul %19, %21, %cst_17 {dimension_numbers = #tpu.dot_dimension_numbers<[1], [0], [0], [1], [0, 0, 1, 1], [], []>} : vector<2x128xbf16>, vector<128x128xbf16>, vector<2x128xf32> -> vector<2x128xf32>
      %c0_18 = arith.constant 0 : index
      %c0_19 = arith.constant 0 : index
      %23 = vector.load %arg6[%c0_18, %c0_19] : memref<1x128xf32, #tpu.memory_space<vmem>>, vector<1x128xf32>
      %24 = vector.broadcast %23 : vector<1x128xf32> to vector<2x128xf32>
      %25 = arith.addf %22, %24 : vector<2x128xf32>
      %c0_20 = arith.constant 0 : index
      %c0_21 = arith.constant 0 : index
      %26 = vector.load %arg14[%c0_20, %c0_21] : memref<2x128xf32, #tpu.memory_space<vmem>>, vector<2x128xf32>
      tpu.vector_store %arg14[%c0_20, %c0_21], %25 {strides = array<i32>} : memref<2x128xf32, #tpu.memory_space<vmem>>, vector<2x128xf32>,
      %27 = arith.mulf %17, %17 : vector<2x128xf32>
      %cst_22 = arith.constant dense<0.000000e+00> : vector<2xf32>
      %28 = vector.multi_reduction <add>, %27, %cst_22 [1] : vector<2x128xf32> to vector<2xf32>
      %29 = vector.shape_cast %28 : vector<2xf32> to vector<2x1xf32>
      %cst_23 = arith.constant 9.99999996E-13 : f32
      %30 = vector.broadcast %cst_23 : f32 to vector<2x1xf32>
      %31 = arith.addf %29, %30 : vector<2x1xf32>
      %32 = math.rsqrt %31 : vector<2x1xf32>
      %33 = vector.broadcast %32 : vector<2x1xf32> to vector<2x128xf32>
      %34 = arith.mulf %17, %33 : vector<2x128xf32>
      %35 = tpu.iota {dimensions = array<i32: 1>} : vector<2x16xi32>
      %c0_24 = arith.constant 0 : index
      %c0_25 = arith.constant 0 : index
      %36 = vector.load %arg1[%c0_24, %c0_25] : memref<2x1xi32, #tpu.memory_space<vmem>>, vector<2x1xi32>
      %37 = vector.broadcast %36 : vector<2x1xi32> to vector<2x16xi32>
      %38 = arith.cmpi eq, %35, %37 : vector<2x16xi32>
      %39 = arith.extui %38 : vector<2x16xi1> to vector<2x16xi32>
      %40 = arith.sitofp %39 : vector<2x16xi32> to vector<2x16xf32>
      %c0_26 = arith.constant 0 : index
      %c0_27 = arith.constant 0 : index
      %41 = vector.load %arg7[%c0_26, %c0_27] : memref<16x32xf32, #tpu.memory_space<vmem>>, vector<16x32xf32>
      %cst_28 = arith.constant dense<0.000000e+00> : vector<2x32xf32>
      %42 = tpu.matmul %40, %41, %cst_28 {dimension_numbers = #tpu.dot_dimension_numbers<[1], [0], [0], [1], [0, 0, 1, 1], [], []>} : vector<2x16xf32>, vector<16x32xf32>, vector<2x32xf32> -> vector<2x32xf32>
      %43 = arith.truncf %42 : vector<2x32xf32> to vector<2x32xbf16>
      %c0_29 = arith.constant 0 : index
      %c0_30 = arith.constant 0 : index
      %44 = vector.load %arg8[%c0_29, %c0_30] : memref<32x128xf32, #tpu.memory_space<vmem>>, vector<32x128xf32>
      %45 = arith.truncf %44 : vector<32x128xf32> to vector<32x128xbf16>
      %cst_31 = arith.constant dense<0.000000e+00> : vector<2x128xf32>
      %46 = tpu.matmul %43, %45, %cst_31 {dimension_numbers = #tpu.dot_dimension_numbers<[1], [0], [0], [1], [0, 0, 1, 1], [], []>} : vector<2x32xbf16>, vector<32x128xbf16>, vector<2x128xf32> -> vector<2x128xf32>
      %c0_32 = arith.constant 0 : index
      %c0_33 = arith.constant 0 : index
      %47 = vector.load %arg9[%c0_32, %c0_33] : memref<1x128xf32, #tpu.memory_space<vmem>>, vector<1x128xf32>
      %48 = vector.broadcast %47 : vector<1x128xf32> to vector<2x128xf32>
      %49 = arith.addf %46, %48 : vector<2x128xf32>
      %c0_34 = arith.constant 0 : index
      %c0_35 = arith.constant 0 : index
      %50 = vector.load %arg16[%c0_34, %c0_35] : memref<2x128xf32, #tpu.memory_space<vmem>>, vector<2x128xf32>
      tpu.vector_store %arg16[%c0_34, %c0_35], %49 {strides = array<i32>} : memref<2x128xf32, #tpu.memory_space<vmem>>, vector<2x128xf32>,
      %cst_36 = arith.constant 5.000000e-01 : f32
      %51 = vector.broadcast %cst_36 : f32 to vector<2x128xf32>
      %52 = arith.mulf %51, %49 : vector<2x128xf32>
      %53 = arith.addf %34, %52 : vector<2x128xf32>
      %c0_37 = arith.constant 0 : index
      %c0_38 = arith.constant 0 : index
      %54 = vector.load %arg12[%c0_37, %c0_38] : memref<2x128xf32, #tpu.memory_space<vmem>>, vector<2x128xf32>
      tpu.vector_store %arg12[%c0_37, %c0_38], %53 {strides = array<i32>} : memref<2x128xf32, #tpu.memory_space<vmem>>, vector<2x128xf32>,
      %55 = arith.truncf %53 : vector<2x128xf32> to vector<2x128xbf16>
      %c0_39 = arith.constant 0 : index
      %c0_40 = arith.constant 0 : index
      %56 = vector.load %arg10[%c0_39, %c0_40] : memref<128x128xf32, #tpu.memory_space<vmem>>, vector<128x128xf32>
      %57 = arith.truncf %56 : vector<128x128xf32> to vector<128x128xbf16>
      %cst_41 = arith.constant dense<0.000000e+00> : vector<2x128xf32>
      %58 = tpu.matmul %55, %57, %cst_41 {dimension_numbers = #tpu.dot_dimension_numbers<[1], [0], [0], [1], [0, 0, 1, 1], [], []>} : vector<2x128xbf16>, vector<128x128xbf16>, vector<2x128xf32> -> vector<2x128xf32>
      %c0_42 = arith.constant 0 : index
      %c0_43 = arith.constant 0 : index
      %59 = vector.load %arg11[%c0_42, %c0_43] : memref<1x128xf32, #tpu.memory_space<vmem>>, vector<1x128xf32>
      %60 = vector.broadcast %59 : vector<1x128xf32> to vector<2x128xf32>
      %61 = arith.addf %58, %60 : vector<2x128xf32>
      %c0_44 = arith.constant 0 : index
      %c0_45 = arith.constant 0 : index
      %62 = vector.load %arg13[%c0_44, %c0_45] : memref<2x128xf32, #tpu.memory_space<vmem>>, vector<2x128xf32>
      tpu.vector_store %arg13[%c0_44, %c0_45], %61 {strides = array<i32>} : memref<2x128xf32, #tpu.memory_space<vmem>>, vector<2x128xf32>,
    } else {
    }
    return
  }
  func.func @transform_0(%arg0: i32) -> (i32, i32) {
    %c0_i32 = arith.constant 0 : i32
    %c0_i32_0 = arith.constant 0 : i32
    %c0_i32_1 = arith.constant 0 : i32
    return %c0_i32, %c0_i32_0 : i32, i32
  }
  func.func @transform_1(%arg0: i32) -> (i32, i32) {
    %c0_i32 = arith.constant 0 : i32
    %c0_i32_0 = arith.constant 0 : i32
    return %c0_i32, %arg0 : i32, i32
  }
  func.func @transform_2(%arg0: i32) -> (i32, i32) {
    %c0_i32 = arith.constant 0 : i32
    %c0_i32_0 = arith.constant 0 : i32
    return %arg0, %c0_i32 : i32, i32
  }
  func.func @transform_3(%arg0: i32) -> (i32, i32) {
    %c0_i32 = arith.constant 0 : i32
    %c0_i32_0 = arith.constant 0 : i32
    %c0_i32_1 = arith.constant 0 : i32
    return %c0_i32, %c0_i32_0 : i32, i32
  }
  func.func @transform_4(%arg0: i32) -> (i32, i32) {
    %c0_i32 = arith.constant 0 : i32
    %c0_i32_0 = arith.constant 0 : i32
    %c0_i32_1 = arith.constant 0 : i32
    return %c0_i32, %c0_i32_0 : i32, i32
  }
  func.func @transform_5(%arg0: i32) -> (i32, i32) {
    %c0_i32 = arith.constant 0 : i32
    %c0_i32_0 = arith.constant 0 : i32
    %c0_i32_1 = arith.constant 0 : i32
    return %c0_i32, %c0_i32_0 : i32, i32
  }
  func.func @transform_6(%arg0: i32) -> (i32, i32) {
    %c0_i32 = arith.constant 0 : i32
    %c0_i32_0 = arith.constant 0 : i32
    %c0_i32_1 = arith.constant 0 : i32
    return %c0_i32, %c0_i32_0 : i32, i32
  }
  func.func @transform_7(%arg0: i32) -> (i32, i32) {
    %c0_i32 = arith.constant 0 : i32
    %c0_i32_0 = arith.constant 0 : i32
    %c0_i32_1 = arith.constant 0 : i32
    return %c0_i32, %c0_i32_0 : i32, i32
  }
  func.func @transform_8(%arg0: i32) -> (i32, i32) {
    %c0_i32 = arith.constant 0 : i32
    %c0_i32_0 = arith.constant 0 : i32
    %c0_i32_1 = arith.constant 0 : i32
    return %c0_i32, %c0_i32_0 : i32, i32
  }
  func.func @transform_9(%arg0: i32) -> (i32, i32) {
    %c0_i32 = arith.constant 0 : i32
    %c0_i32_0 = arith.constant 0 : i32
    %c0_i32_1 = arith.constant 0 : i32
    return %c0_i32, %c0_i32_0 : i32, i32
  }
  func.func @transform_10(%arg0: i32) -> (i32, i32) {
    %c0_i32 = arith.constant 0 : i32
    %c0_i32_0 = arith.constant 0 : i32
    %c0_i32_1 = arith.constant 0 : i32
    return %c0_i32, %c0_i32_0 : i32, i32
  }
  func.func @transform_11(%arg0: i32) -> (i32, i32) {
    %c0_i32 = arith.constant 0 : i32
    %c0_i32_0 = arith.constant 0 : i32
    %c0_i32_1 = arith.constant 0 : i32
    return %c0_i32, %c0_i32_0 : i32, i32
  }
  func.func @transform_12(%arg0: i32) -> (i32, i32) {
    %c0_i32 = arith.constant 0 : i32
    %c0_i32_0 = arith.constant 0 : i32
    %c0_i32_1 = arith.constant 0 : i32
    return %c0_i32, %c0_i32_0 : i32, i32
  }
  func.func @transform_13(%arg0: i32) -> (i32, i32) {
    %c0_i32 = arith.constant 0 : i32
    %c0_i32_0 = arith.constant 0 : i32
    %c0_i32_1 = arith.constant 0 : i32
    return %c0_i32, %c0_i32_0 : i32, i32
  }
  func.func @transform_14(%arg0: i32) -> (i32, i32) {
    %c0_i32 = arith.constant 0 : i32
    %c0_i32_0 = arith.constant 0 : i32
    %c0_i32_1 = arith.constant 0 : i32
    return %c0_i32, %c0_i32_0 : i32, i32
  }
  func.func @transform_15(%arg0: i32) -> (i32, i32) {
    %c0_i32 = arith.constant 0 : i32
    %c0_i32_0 = arith.constant 0 : i32
    %c0_i32_1 = arith.constant 0 : i32
    return %c0_i32, %c0_i32_0 : i32, i32
  }
}

</mosaic_0001>

<llo_original>
// kernel: tpu_custom_call.1
$region0: #{tpu_custom_call.1}
  #allocation0 [shape = 'u32[]', space=smem, size = 0x4, offset = 0x4, fixed_abs, tag = 'smem constant byte address 0x4 - core index']
  #allocation1 [shape = 'u32[72,128]{1,0:T(1,128)}', space=vmem, size = 0x9000, scoped, tag = 'internal scratch']
  #allocation2 [shape = 'f32[2,128]{1,0:T(2,128)}', space=vmem, size = 0x400, scoped, tag = 'scratch operand']
  %s0 = inlined_call_operand.vmem [shape: s32[2,1], index: 0, kind: input, shape index: {}]
  %s1 = inlined_call_operand.hbm [shape: f32[2,1024], index: 1, kind: input, shape index: {}]
  %s2 = inlined_call_operand.hbm [shape: f32[1024,128], index: 2, kind: input, shape index: {}]
  %s3 = inlined_call_operand.vmem [shape: f32[1,128], index: 3, kind: input, shape index: {}]
  %s4 = inlined_call_operand.hbm [shape: f32[128,128], index: 4, kind: input, shape index: {}]
  %s5 = inlined_call_operand.vmem [shape: f32[1,128], index: 5, kind: input, shape index: {}]
  %s6 = inlined_call_operand.hbm [shape: f32[16,32], index: 6, kind: input, shape index: {}]
  %s7 = inlined_call_operand.hbm [shape: f32[32,128], index: 7, kind: input, shape index: {}]
  %s8 = inlined_call_operand.vmem [shape: f32[1,128], index: 8, kind: input, shape index: {}]
  %s9 = inlined_call_operand.hbm [shape: f32[128,128], index: 9, kind: input, shape index: {}]
  %s10 = inlined_call_operand.vmem [shape: f32[1,128], index: 10, kind: input, shape index: {}]
  %s11 = inlined_call_operand.hbm [shape: f32[2,128], index: 11, kind: output, shape index: {0}]
  %s12 = inlined_call_operand.hbm [shape: f32[2,128], index: 12, kind: output, shape index: {1}]
  %s13 = inlined_call_operand.hbm [shape: f32[2,128], index: 13, kind: output, shape index: {2}]
  %s14 = inlined_call_operand.hbm [shape: f32[2,128], index: 14, kind: output, shape index: {3}]
  %s15 = inlined_call_operand.hbm [shape: f32[2,128], index: 15, kind: output, shape index: {4}]
  %16 = xla_tuple %s11, %s12, %s13, %s14, %s15
  %s17 = sld [smem:[#allocation0]]
  $region141: #{tpu_custom_call.1} parent=0
    _
  %s19 = ssub.s32 1, %s17
  %s20 = scalar_select 0, %s19, %s17
  $region1: #{tpu_custom_call.1} parent=0
    #allocation3 [shape = 'u8[8192]{0}', space=vmem, size = 0x2000, scoped, tag = 'input window, operand 1']
    #allocation4 [shape = 's32[2]{0}', space=sflag, size = 0x8, scoped, tag = 'scoped memory for tpu_custom_call.1']
    #allocation5 [shape = 's32[2]{0}', space=sflag, size = 0x8, scoped, tag = 'scoped memory for tpu_custom_call.1']
    #allocation6 [shape = 'u8[524288]{0}', space=vmem, size = 0x80000, scoped, tag = 'input window, operand 2']
    #allocation7 [shape = 's32[2]{0}', space=sflag, size = 0x8, scoped, tag = 'scoped memory for tpu_custom_call.1']
    #allocation8 [shape = 'u8[65536]{0}', space=vmem, size = 0x10000, scoped, tag = 'input window, operand 4, single buffered']
    #allocation9 [shape = 'u8[8192]{0}', space=vmem, size = 0x2000, scoped, tag = 'input window, operand 6, single buffered']
    #allocation10 [shape = 's32[1]{0}', space=sflag, size = 0x4, scoped, tag = 'scoped memory for tpu_custom_call.1']
    #allocation11 [shape = 'u8[16384]{0}', space=vmem, size = 0x4000, scoped, tag = 'input window, operand 7, single buffered']
    #allocation12 [shape = 'u8[65536]{0}', space=vmem, size = 0x10000, scoped, tag = 'input window, operand 9, single buffered']
    #allocation13 [shape = 's32[1]{0}', space=sflag, size = 0x4, scoped, tag = 'scoped memory for tpu_custom_call.1']
    #allocation14 [shape = 'u8[1024]{0}', space=vmem, size = 0x400, scoped, tag = 'output window, operand 0, single buffered']
    #allocation15 [shape = 'u8[1024]{0}', space=vmem, size = 0x400, scoped, tag = 'output window, operand 1, single buffered']
    #allocation16 [shape = 's32[1]{0}', space=sflag, size = 0x4, scoped, tag = 'scoped memory for tpu_custom_call.1']
    #allocation17 [shape = 'u8[1024]{0}', space=vmem, size = 0x400, scoped, tag = 'output window, operand 2, single buffered']
    #allocation18 [shape = 'u8[1024]{0}', space=vmem, size = 0x400, scoped, tag = 'output window, operand 3, single buffered']
    #allocation19 [shape = 's32[1]{0}', space=sflag, size = 0x4, scoped, tag = 'scoped memory for tpu_custom_call.1']
    #allocation20 [shape = 'u8[1024]{0}', space=vmem, size = 0x400, scoped, tag = 'output window, operand 4, single buffered']
    %21 = vsyncpa [#allocation4], 0
    %s22 = scalar_lea.sflag [#allocation4], 1
    %23 = vsyncpa %s22, 0
    %24 = vsyncpa [#allocation7], 0
    %s25 = scalar_lea.sflag [#allocation7], 1
    %26 = vsyncpa %s25, 0
    %27 = vsyncpa [#allocation10], 0
    %28 = vsyncpa [#allocation13], 0
    %29 = vsyncpa [#allocation5], 0
    %30 = vsyncpa [#allocation16], 0
    %31 = vsyncpa [#allocation19], 0
    loop: start=0, step=1, limit=4
    $region2: #{tpu_custom_call.1} parent=1 // loop_pre_header
      _
    $region3: #{tpu_custom_call.1} parent=1 // loop_header
      %s33 = sphi 0, %s37
      %p34 = scmp.ge.s32.totalorder %s33, 4
      %s41 = sphi 0, %s41
      %s43 = sphi 0, %s41
      %s44 = sphi 0, %s43
      %s58 = sphi 0, %s44
      %s64 = sphi 0, %s66
      %s67 = sphi 0, %s64
      %s68 = sphi 0, %s67
      %s84 = sphi 0, %s68
      %s90 = sphi 0, %s92
      %s93 = sphi 0, %s90
      %s94 = sphi 0, %s93
      %s110 = sphi 0, %s94
      %s114 = sphi 0, %s114
      %s116 = sphi 0, %s114
      %s117 = sphi 0, %s116
      %s131 = sphi 0, %s117
      %s135 = sphi 0, %s135
      %s137 = sphi 0, %s135
      %s138 = sphi 0, %s137
      %s152 = sphi 0, %s138
      %s156 = sphi 0, %s156
      %s158 = sphi 0, %s156
      %s159 = sphi 0, %s158
      %s173 = sphi 0, %s159
      %s177 = sphi 0, %s177
      %s179 = sphi 0, %s177
      %s180 = sphi 0, %s179
      %s194 = sphi 0, %s180
      %s198 = sphi 0, %s198
      %s200 = sphi 0, %s198
      %s201 = sphi 0, %s200
      %s215 = sphi 0, %s201
      %s219 = sphi 0, %s219
      %s221 = sphi 0, %s219
      %s222 = sphi 0, %s221
      %s236 = sphi 0, %s222
      %s240 = sphi 0, %s240
      %s242 = sphi 0, %s240
      %s243 = sphi 0, %s242
      %s257 = sphi 0, %s243
      %s261 = sphi 0, %s261
      %s263 = sphi 0, %s261
      %s264 = sphi 0, %s263
      %s278 = sphi 0, %s264
      %s282 = sphi 0, %s282
      %s284 = sphi 0, %s282
      %s285 = sphi 0, %s284
      %s299 = sphi 0, %s285
      %s303 = sphi 0, %s303
      %s305 = sphi 0, %s303
      %s306 = sphi 0, %s305
      %s320 = sphi 0, %s306
      %s324 = sphi 0, %s324
      %s326 = sphi 0, %s324
      %s327 = sphi 0, %s326
      %s341 = sphi 0, %s327
      %s345 = sphi 0, %s345
      %s347 = sphi 0, %s345
      %s348 = sphi 0, %s347
      %s362 = sphi 0, %s348
      %s366 = sphi 0, %s366
      %s368 = sphi 0, %s366
      %s369 = sphi 0, %s368
      %s383 = sphi 0, %s369
    $region4: #{tpu_custom_call.1} parent=1 // loop_header_branch
      %36 = sbr.rel (%p34) target = $region8
    $region5: #{tpu_custom_call.1} parent=1 // loop_body
      %s38 = ssub.s32 %s33, 1
      %s39 = ssub.s32 %s33, 2
      %s40 = sadd.s32 %s33, 1
      %s42 = sadd.s32 %s41, 1
      %p45 = scmp.eq.s32.totalorder %s33, 1
      %p46 = scmp.ne.s32.totalorder %s41, %s43
      %p47 = scmp.eq.s32.totalorder %s33, 0
      %p48 = por %p46, %p47
      %p49 = scmp.ne.s32.totalorder %s41, %s43
      %p50 = scmp.eq.s32.totalorder %s38, 1
      %p51 = por %p49, %p50
      %p52 = scmp.ne.s32.totalorder %s43, %s44
      %p53 = scmp.eq.s32.totalorder %s38, 0
      %p54 = por %p52, %p53
      %p55 = scmp.ne.s32.totalorder %s43, %s44
      %p56 = scmp.eq.s32.totalorder %s39, 1
      %p57 = por %p55, %p56
      %p59 = scmp.ne.s32.totalorder %s44, %s58
      %p60 = scmp.eq.s32.totalorder %s39, 0
      %p61 = por %p59, %p60
      %s62 = ssub.s32 %s33, %s40
      %p63 = scmp.eq.s32.totalorder %s62, 0
      %s65 = sadd.s32 %s64, 1
      %s66 = scalar_select %p63, %s64, %s65
      %p69 = pneg %p63
      %p70 = scmp.eq.s32.totalorder %s33, 1
      %p71 = por %p69, %p70
      %p72 = scmp.ne.s32.totalorder %s64, %s67
      %p73 = scmp.eq.s32.totalorder %s33, 0
      %p74 = por %p72, %p73
      %p75 = scmp.ne.s32.totalorder %s64, %s67
      %p76 = scmp.eq.s32.totalorder %s38, 1
      %p77 = por %p75, %p76
      %p78 = scmp.ne.s32.totalorder %s67, %s68
      %p79 = scmp.eq.s32.totalorder %s38, 0
      %p80 = por %p78, %p79
      %p81 = scmp.ne.s32.totalorder %s67, %s68
      %p82 = scmp.eq.s32.totalorder %s39, 1
      %p83 = por %p81, %p82
      %p85 = scmp.ne.s32.totalorder %s68, %s84
      %p86 = scmp.eq.s32.totalorder %s39, 0
      %p87 = por %p85, %p86
      %s88 = ssub.s32 %s33, %s40
      %p89 = scmp.eq.s32.totalorder %s88, 0
      %s91 = sadd.s32 %s90, 1
      %s92 = scalar_select %p89, %s90, %s91
      %p95 = pneg %p89
      %p96 = scmp.eq.s32.totalorder %s33, 1
      %p97 = por %p95, %p96
      %p98 = scmp.ne.s32.totalorder %s90, %s93
      %p99 = scmp.eq.s32.totalorder %s33, 0
      %p100 = por %p98, %p99
      %p101 = scmp.ne.s32.totalorder %s90, %s93
      %p102 = scmp.eq.s32.totalorder %s38, 1
      %p103 = por %p101, %p102
      %p104 = scmp.ne.s32.totalorder %s93, %s94
      %p105 = scmp.eq.s32.totalorder %s38, 0
      %p106 = por %p104, %p105
      %p107 = scmp.ne.s32.totalorder %s93, %s94
      %p108 = scmp.eq.s32.totalorder %s39, 1
      %p109 = por %p107, %p108
      %p111 = scmp.ne.s32.totalorder %s94, %s110
      %p112 = scmp.eq.s32.totalorder %s39, 0
      %p113 = por %p111, %p112
      %s115 = sadd.s32 %s114, 1
      %p118 = scmp.eq.s32.totalorder %s33, 1
      %p119 = scmp.ne.s32.totalorder %s114, %s116
      %p120 = scmp.eq.s32.totalorder %s33, 0
      %p121 = por %p119, %p120
      %p122 = scmp.ne.s32.totalorder %s114, %s116
      %p123 = scmp.eq.s32.totalorder %s38, 1
      %p124 = por %p122, %p123
      %p125 = scmp.ne.s32.totalorder %s116, %s117
      %p126 = scmp.eq.s32.totalorder %s38, 0
      %p127 = por %p125, %p126
      %p128 = scmp.ne.s32.totalorder %s116, %s117
      %p129 = scmp.eq.s32.totalorder %s39, 1
      %p130 = por %p128, %p129
      %p132 = scmp.ne.s32.totalorder %s117, %s131
      %p133 = scmp.eq.s32.totalorder %s39, 0
      %p134 = por %p132, %p133
      %s136 = sadd.s32 %s135, 1
      %p139 = scmp.eq.s32.totalorder %s33, 1
      %p140 = scmp.ne.s32.totalorder %s135, %s137
      %p141 = scmp.eq.s32.totalorder %s33, 0
      %p142 = por %p140, %p141
      %p143 = scmp.ne.s32.totalorder %s135, %s137
      %p144 = scmp.eq.s32.totalorder %s38, 1
      %p145 = por %p143, %p144
      %p146 = scmp.ne.s32.totalorder %s137, %s138
      %p147 = scmp.eq.s32.totalorder %s38, 0
      %p148 = por %p146, %p147
      %p149 = scmp.ne.s32.totalorder %s137, %s138
      %p150 = scmp.eq.s32.totalorder %s39, 1
      %p151 = por %p149, %p150
      %p153 = scmp.ne.s32.totalorder %s138, %s152
      %p154 = scmp.eq.s32.totalorder %s39, 0
      %p155 = por %p153, %p154
      %s157 = sadd.s32 %s156, 1
      %p160 = scmp.eq.s32.totalorder %s33, 1
      %p161 = scmp.ne.s32.totalorder %s156, %s158
      %p162 = scmp.eq.s32.totalorder %s33, 0
      %p163 = por %p161, %p162
      %p164 = scmp.ne.s32.totalorder %s156, %s158
      %p165 = scmp.eq.s32.totalorder %s38, 1
      %p166 = por %p164, %p165
      %p167 = scmp.ne.s32.totalorder %s158, %s159
      %p168 = scmp.eq.s32.totalorder %s38, 0
      %p169 = por %p167, %p168
      %p170 = scmp.ne.s32.totalorder %s158, %s159
      %p171 = scmp.eq.s32.totalorder %s39, 1
      %p172 = por %p170, %p171
      %p174 = scmp.ne.s32.totalorder %s159, %s173
      %p175 = scmp.eq.s32.totalorder %s39, 0
      %p176 = por %p174, %p175
      %s178 = sadd.s32 %s177, 1
      %p181 = scmp.eq.s32.totalorder %s33, 1
      %p182 = scmp.ne.s32.totalorder %s177, %s179
      %p183 = scmp.eq.s32.totalorder %s33, 0
      %p184 = por %p182, %p183
      %p185 = scmp.ne.s32.totalorder %s177, %s179
      %p186 = scmp.eq.s32.totalorder %s38, 1
      %p187 = por %p185, %p186
      %p188 = scmp.ne.s32.totalorder %s179, %s180
      %p189 = scmp.eq.s32.totalorder %s38, 0
      %p190 = por %p188, %p189
      %p191 = scmp.ne.s32.totalorder %s179, %s180
      %p192 = scmp.eq.s32.totalorder %s39, 1
      %p193 = por %p191, %p192
      %p195 = scmp.ne.s32.totalorder %s180, %s194
      %p196 = scmp.eq.s32.totalorder %s39, 0
      %p197 = por %p195, %p196
      %s199 = sadd.s32 %s198, 1
      %p202 = scmp.eq.s32.totalorder %s33, 1
      %p203 = scmp.ne.s32.totalorder %s198, %s200
      %p204 = scmp.eq.s32.totalorder %s33, 0
      %p205 = por %p203, %p204
      %p206 = scmp.ne.s32.totalorder %s198, %s200
      %p207 = scmp.eq.s32.totalorder %s38, 1
      %p208 = por %p206, %p207
      %p209 = scmp.ne.s32.totalorder %s200, %s201
      %p210 = scmp.eq.s32.totalorder %s38, 0
      %p211 = por %p209, %p210
      %p212 = scmp.ne.s32.totalorder %s200, %s201
      %p213 = scmp.eq.s32.totalorder %s39, 1
      %p214 = por %p212, %p213
      %p216 = scmp.ne.s32.totalorder %s201, %s215
      %p217 = scmp.eq.s32.totalorder %s39, 0
      %p218 = por %p216, %p217
      %s220 = sadd.s32 %s219, 1
      %p223 = scmp.eq.s32.totalorder %s33, 1
      %p224 = scmp.ne.s32.totalorder %s219, %s221
      %p225 = scmp.eq.s32.totalorder %s33, 0
      %p226 = por %p224, %p225
      %p227 = scmp.ne.s32.totalorder %s219, %s221
      %p228 = scmp.eq.s32.totalorder %s38, 1
      %p229 = por %p227, %p228
      %p230 = scmp.ne.s32.totalorder %s221, %s222
      %p231 = scmp.eq.s32.totalorder %s38, 0
      %p232 = por %p230, %p231
      %p233 = scmp.ne.s32.totalorder %s221, %s222
      %p234 = scmp.eq.s32.totalorder %s39, 1
      %p235 = por %p233, %p234
      %p237 = scmp.ne.s32.totalorder %s222, %s236
      %p238 = scmp.eq.s32.totalorder %s39, 0
      %p239 = por %p237, %p238
      %s241 = sadd.s32 %s240, 1
      %p244 = scmp.eq.s32.totalorder %s33, 1
      %p245 = scmp.ne.s32.totalorder %s240, %s242
      %p246 = scmp.eq.s32.totalorder %s33, 0
      %p247 = por %p245, %p246
      %p248 = scmp.ne.s32.totalorder %s240, %s242
      %p249 = scmp.eq.s32.totalorder %s38, 1
      %p250 = por %p248, %p249
      %p251 = scmp.ne.s32.totalorder %s242, %s243
      %p252 = scmp.eq.s32.totalorder %s38, 0
      %p253 = por %p251, %p252
      %p254 = scmp.ne.s32.totalorder %s242, %s243
      %p255 = scmp.eq.s32.totalorder %s39, 1
      %p256 = por %p254, %p255
      %p258 = scmp.ne.s32.totalorder %s243, %s257
      %p259 = scmp.eq.s32.totalorder %s39, 0
      %p260 = por %p258, %p259
      %s262 = sadd.s32 %s261, 1
      %p265 = scmp.eq.s32.totalorder %s33, 1
      %p266 = scmp.ne.s32.totalorder %s261, %s263
      %p267 = scmp.eq.s32.totalorder %s33, 0
      %p268 = por %p266, %p267
      %p269 = scmp.ne.s32.totalorder %s261, %s263
      %p270 = scmp.eq.s32.totalorder %s38, 1
      %p271 = por %p269, %p270
      %p272 = scmp.ne.s32.totalorder %s263, %s264
      %p273 = scmp.eq.s32.totalorder %s38, 0
      %p274 = por %p272, %p273
      %p275 = scmp.ne.s32.totalorder %s263, %s264
      %p276 = scmp.eq.s32.totalorder %s39, 1
      %p277 = por %p275, %p276
      %p279 = scmp.ne.s32.totalorder %s264, %s278
      %p280 = scmp.eq.s32.totalorder %s39, 0
      %p281 = por %p279, %p280
      %s283 = sadd.s32 %s282, 1
      %p286 = scmp.eq.s32.totalorder %s33, 1
      %p287 = scmp.ne.s32.totalorder %s282, %s284
      %p288 = scmp.eq.s32.totalorder %s33, 0
      %p289 = por %p287, %p288
      %p290 = scmp.ne.s32.totalorder %s282, %s284
      %p291 = scmp.eq.s32.totalorder %s38, 1
      %p292 = por %p290, %p291
      %p293 = scmp.ne.s32.totalorder %s284, %s285
      %p294 = scmp.eq.s32.totalorder %s38, 0
      %p295 = por %p293, %p294
      %p296 = scmp.ne.s32.totalorder %s284, %s285
      %p297 = scmp.eq.s32.totalorder %s39, 1
      %p298 = por %p296, %p297
      %p300 = scmp.ne.s32.totalorder %s285, %s299
      %p301 = scmp.eq.s32.totalorder %s39, 0
      %p302 = por %p300, %p301
      %s304 = sadd.s32 %s303, 1
      %p307 = scmp.eq.s32.totalorder %s33, 1
      %p308 = scmp.ne.s32.totalorder %s303, %s305
      %p309 = scmp.eq.s32.totalorder %s33, 0
      %p310 = por %p308, %p309
      %p311 = scmp.ne.s32.totalorder %s303, %s305
      %p312 = scmp.eq.s32.totalorder %s38, 1
      %p313 = por %p311, %p312
      %p314 = scmp.ne.s32.totalorder %s305, %s306
      %p315 = scmp.eq.s32.totalorder %s38, 0
      %p316 = por %p314, %p315
      %p317 = scmp.ne.s32.totalorder %s305, %s306
      %p318 = scmp.eq.s32.totalorder %s39, 1
      %p319 = por %p317, %p318
      %p321 = scmp.ne.s32.totalorder %s306, %s320
      %p322 = scmp.eq.s32.totalorder %s39, 0
      %p323 = por %p321, %p322
      %s325 = sadd.s32 %s324, 1
      %p328 = scmp.eq.s32.totalorder %s33, 1
      %p329 = scmp.ne.s32.totalorder %s324, %s326
      %p330 = scmp.eq.s32.totalorder %s33, 0
      %p331 = por %p329, %p330
      %p332 = scmp.ne.s32.totalorder %s324, %s326
      %p333 = scmp.eq.s32.totalorder %s38, 1
      %p334 = por %p332, %p333
      %p335 = scmp.ne.s32.totalorder %s326, %s327
      %p336 = scmp.eq.s32.totalorder %s38, 0
      %p337 = por %p335, %p336
      %p338 = scmp.ne.s32.totalorder %s326, %s327
      %p339 = scmp.eq.s32.totalorder %s39, 1
      %p340 = por %p338, %p339
      %p342 = scmp.ne.s32.totalorder %s327, %s341
      %p343 = scmp.eq.s32.totalorder %s39, 0
      %p344 = por %p342, %p343
      %s346 = sadd.s32 %s345, 1
      %p349 = scmp.eq.s32.totalorder %s33, 1
      %p350 = scmp.ne.s32.totalorder %s345, %s347
      %p351 = scmp.eq.s32.totalorder %s33, 0
      %p352 = por %p350, %p351
      %p353 = scmp.ne.s32.totalorder %s345, %s347
      %p354 = scmp.eq.s32.totalorder %s38, 1
      %p355 = por %p353, %p354
      %p356 = scmp.ne.s32.totalorder %s347, %s348
      %p357 = scmp.eq.s32.totalorder %s38, 0
      %p358 = por %p356, %p357
      %p359 = scmp.ne.s32.totalorder %s347, %s348
      %p360 = scmp.eq.s32.totalorder %s39, 1
      %p361 = por %p359, %p360
      %p363 = scmp.ne.s32.totalorder %s348, %s362
      %p364 = scmp.eq.s32.totalorder %s39, 0
      %p365 = por %p363, %p364
      %s367 = sadd.s32 %s366, 1
      %p370 = scmp.eq.s32.totalorder %s33, 1
      %p371 = scmp.ne.s32.totalorder %s366, %s368
      %p372 = scmp.eq.s32.totalorder %s33, 0
      %p373 = por %p371, %p372
      %p374 = scmp.ne.s32.totalorder %s366, %s368
      %p375 = scmp.eq.s32.totalorder %s38, 1
      %p376 = por %p374, %p375
      %p377 = scmp.ne.s32.totalorder %s368, %s369
      %p378 = scmp.eq.s32.totalorder %s38, 0
      %p379 = por %p377, %p378
      %p380 = scmp.ne.s32.totalorder %s368, %s369
      %p381 = scmp.eq.s32.totalorder %s39, 1
      %p382 = por %p380, %p381
      %p384 = scmp.ne.s32.totalorder %s369, %s383
      %p385 = scmp.eq.s32.totalorder %s39, 0
      %p386 = por %p384, %p385
      %p387 = scmp.le.s32.totalorder 1, %s33
      %p388 = scmp.lt.s32.totalorder %s33, 3
      %p389 = pnand %p387, %p388
      %p390 = pneg %p389
      // Predicated region
      $region9: #{tpu_custom_call.1} parent=5 // pred_check
        _
      $region10: #{tpu_custom_call.1} parent=5 // pred_check_branch
        %392 = sbr.rel (%p389) target = $region12
      $region11: #{tpu_custom_call.1} parent=5 // pred_region
        %s393 = ssub.s32 %s33, 1
        // Predicated region
        $region13: #{tpu_custom_call.1} parent=11 // pred_check
          %p394 = pneg %p54
        $region14: #{tpu_custom_call.1} parent=11 // pred_check_branch
          %396 = sbr.rel (%p394) target = $region16
        $region15: #{tpu_custom_call.1} parent=11 // pred_region
          _
        $region16: #{tpu_custom_call.1} parent=11 // pred_fallthru
          _
        // Predicated region
        $region17: #{tpu_custom_call.1} parent=11 // pred_check
          %p397 = pneg %p127
        $region18: #{tpu_custom_call.1} parent=11 // pred_check_branch
          %399 = sbr.rel (%p397) target = $region20
        $region19: #{tpu_custom_call.1} parent=11 // pred_region
          _
        $region20: #{tpu_custom_call.1} parent=11 // pred_fallthru
          _
        // Predicated region
        $region21: #{tpu_custom_call.1} parent=11 // pred_check
          %p400 = pneg %p148
        $region22: #{tpu_custom_call.1} parent=11 // pred_check_branch
          %402 = sbr.rel (%p400) target = $region24
        $region23: #{tpu_custom_call.1} parent=11 // pred_region
          %404 = vsyncadd [#allocation7], 0
          %s405 = sshll.u32 %s4, 4
          %s406 = int_to_ptr.hbm [resolvable:$true] %s405
          %s407 = sshll.u32 [#allocation8], 4
          %s408 = int_to_ptr.vmem [resolvable:$true] %s407
          %413 = dma.hbm_to_vmem [thread:$0]  %s406, 2048, %s408, [#allocation7], 128, 128, 8
        $region24: #{tpu_custom_call.1} parent=11 // pred_fallthru
          _
        // Predicated region
        $region25: #{tpu_custom_call.1} parent=11 // pred_check
          %p414 = pneg %p169
        $region26: #{tpu_custom_call.1} parent=11 // pred_check_branch
          %416 = sbr.rel (%p414) target = $region28
        $region27: #{tpu_custom_call.1} parent=11 // pred_region
          _
        $region28: #{tpu_custom_call.1} parent=11 // pred_fallthru
          _
        // Predicated region
        $region29: #{tpu_custom_call.1} parent=11 // pred_check
          %p417 = pneg %p190
        $region30: #{tpu_custom_call.1} parent=11 // pred_check_branch
          %419 = sbr.rel (%p417) target = $region32
        $region31: #{tpu_custom_call.1} parent=11 // pred_region
          %421 = vsyncadd [#allocation10], 0
          %s422 = sshll.u32 %s6, 4
          %s423 = int_to_ptr.hbm [resolvable:$true] %s422
          %s424 = sshll.u32 [#allocation9], 4
          %s425 = int_to_ptr.vmem [resolvable:$true] %s424
          %430 = dma.hbm_to_vmem [thread:$0]  %s423, 256, %s425, [#allocation10], 128, 128, 8
        $region32: #{tpu_custom_call.1} parent=11 // pred_fallthru
          _
        // Predicated region
        $region33: #{tpu_custom_call.1} parent=11 // pred_check
          %p431 = pneg %p211
        $region34: #{tpu_custom_call.1} parent=11 // pred_check_branch
          %433 = sbr.rel (%p431) target = $region36
        $region35: #{tpu_custom_call.1} parent=11 // pred_region
          %435 = vsyncadd [#allocation10], 0
          %s436 = sshll.u32 %s7, 4
          %s437 = int_to_ptr.hbm [resolvable:$true] %s436
          %s438 = sshll.u32 [#allocation11], 4
          %s439 = int_to_ptr.vmem [resolvable:$true] %s438
          %444 = dma.hbm_to_vmem [thread:$0]  %s437, 512, %s439, [#allocation10], 128, 128, 8
        $region36: #{tpu_custom_call.1} parent=11 // pred_fallthru
          _
        // Predicated region
        $region37: #{tpu_custom_call.1} parent=11 // pred_check
          %p445 = pneg %p232
        $region38: #{tpu_custom_call.1} parent=11 // pred_check_branch
          %447 = sbr.rel (%p445) target = $region40
        $region39: #{tpu_custom_call.1} parent=11 // pred_region
          _
        $region40: #{tpu_custom_call.1} parent=11 // pred_fallthru
          _
        // Predicated region
        $region41: #{tpu_custom_call.1} parent=11 // pred_check
          %p448 = pneg %p253
        $region42: #{tpu_custom_call.1} parent=11 // pred_check_branch
          %450 = sbr.rel (%p448) target = $region44
        $region43: #{tpu_custom_call.1} parent=11 // pred_region
          %452 = vsyncadd [#allocation13], 0
          %s453 = sshll.u32 %s9, 4
          %s454 = int_to_ptr.hbm [resolvable:$true] %s453
          %s455 = sshll.u32 [#allocation12], 4
          %s456 = int_to_ptr.vmem [resolvable:$true] %s455
          %461 = dma.hbm_to_vmem [thread:$0]  %s454, 2048, %s456, [#allocation13], 128, 128, 8
        $region44: #{tpu_custom_call.1} parent=11 // pred_fallthru
          _
        // Predicated region
        $region45: #{tpu_custom_call.1} parent=11 // pred_check
          %p462 = pneg %p274
        $region46: #{tpu_custom_call.1} parent=11 // pred_check_branch
          %464 = sbr.rel (%p462) target = $region48
        $region47: #{tpu_custom_call.1} parent=11 // pred_region
          _
        $region48: #{tpu_custom_call.1} parent=11 // pred_fallthru
          _
      $region12: #{tpu_custom_call.1} parent=5 // pred_fallthru
        _
      %p465 = scmp.lt.s32.totalorder %s33, 2
      // Predicated region
      $region49: #{tpu_custom_call.1} parent=5 // pred_check
        %p466 = pneg %p465
      $region50: #{tpu_custom_call.1} parent=5 // pred_check_branch
        %468 = sbr.rel (%p466) target = $region52
      $region51: #{tpu_custom_call.1} parent=5 // pred_region
        // Predicated region
        $region53: #{tpu_custom_call.1} parent=51 // pred_check
          %p469 = pneg %p74
        $region54: #{tpu_custom_call.1} parent=51 // pred_check_branch
          %471 = sbr.rel (%p469) target = $region56
        $region55: #{tpu_custom_call.1} parent=51 // pred_region
          %s472 = sand.u32 %s64, 1
          %s473 = scalar_lea.sflag [#allocation4], %s472
          %s474 = sand.u32 %s64, 1
          %s475 = smul.addr %s474, 8
          %s476 = scalar_lea.vmem [#allocation3], %s475
          %s477 = smul.u32 4, %s33
          %479 = vsyncadd %s473, 0
          %s480 = smul.addr %s477, 2
          %s481 = scalar_lea.hbm %s1, %s480
          %s483 = sshll.u32 %s481, 4
          %s484 = int_to_ptr.hbm [resolvable:$true] %s483
          %s485 = sshll.u32 %s476, 4
          %s486 = int_to_ptr.vmem [resolvable:$true] %s485
          %488 = dma.hbm_to_vmem [thread:$0]  %s484, 128, %s486, %s473
        $region56: #{tpu_custom_call.1} parent=51 // pred_fallthru
          _
        // Predicated region
        $region57: #{tpu_custom_call.1} parent=51 // pred_check
          %p489 = pneg %p100
        $region58: #{tpu_custom_call.1} parent=51 // pred_check_branch
          %491 = sbr.rel (%p489) target = $region60
        $region59: #{tpu_custom_call.1} parent=51 // pred_region
          %s492 = sand.u32 %s33, 1
          %s493 = scalar_lea.sflag [#allocation7], %s492
          %s494 = sand.u32 %s90, 1
          %s495 = smul.addr %s494, 512
          %s496 = scalar_lea.vmem [#allocation6], %s495
          %s497 = smul.u32 64, %s33
          %499 = vsyncadd %s493, 0
          %s500 = smul.addr %s497, 8
          %s501 = scalar_lea.hbm %s2, %s500
          %s502 = sshll.u32 %s501, 4
          %s503 = int_to_ptr.hbm [resolvable:$true] %s502
          %s504 = sshll.u32 %s496, 4
          %s505 = int_to_ptr.vmem [resolvable:$true] %s504
          %510 = dma.hbm_to_vmem [thread:$0]  %s503, 8192, %s505, %s493, 128, 128, 8
        $region60: #{tpu_custom_call.1} parent=51 // pred_fallthru
          _
      $region52: #{tpu_custom_call.1} parent=5 // pred_fallthru
        _
      %p511 = scmp.le.s32.totalorder 1, %s33
      %p512 = scmp.lt.s32.totalorder %s33, 3
      %p513 = pnand %p511, %p512
      %p514 = pneg %p513
      // Predicated region
      $region61: #{tpu_custom_call.1} parent=5 // pred_check
        _
      $region62: #{tpu_custom_call.1} parent=5 // pred_check_branch
        %516 = sbr.rel (%p513) target = $region64
      $region63: #{tpu_custom_call.1} parent=5 // pred_region
        %s517 = ssub.s32 %s33, 1
        %s518 = sand.u32 %s67, 1
        %s519 = scalar_lea.sflag [#allocation4], %s518
        %s520 = sand.u32 %s67, 1
        %s521 = smul.addr %s520, 8
        %s522 = scalar_lea.vmem [#allocation3], %s521
        // Predicated region
        $region65: #{tpu_custom_call.1} parent=63 // pred_check
          %p523 = pneg %p80
        $region66: #{tpu_custom_call.1} parent=63 // pred_check_branch
          %525 = sbr.rel (%p523) target = $region68
        $region67: #{tpu_custom_call.1} parent=63 // pred_region
          %527 = dma.done %s519, 128
        $region68: #{tpu_custom_call.1} parent=63 // pred_fallthru
          _
        %s528 = sand.u32 %s38, 1
        %s529 = scalar_lea.sflag [#allocation7], %s528
        %s530 = sand.u32 %s93, 1
        %s531 = smul.addr %s530, 512
        %s532 = scalar_lea.vmem [#allocation6], %s531
        // Predicated region
        $region69: #{tpu_custom_call.1} parent=63 // pred_check
          %p533 = pneg %p106
        $region70: #{tpu_custom_call.1} parent=63 // pred_check_branch
          %535 = sbr.rel (%p533) target = $region72
        $region71: #{tpu_custom_call.1} parent=63 // pred_region
          %537 = dma.done %s529, 8192
        $region72: #{tpu_custom_call.1} parent=63 // pred_fallthru
          _
        // Predicated region
        $region73: #{tpu_custom_call.1} parent=63 // pred_check
          %p538 = pneg %p148
        $region74: #{tpu_custom_call.1} parent=63 // pred_check_branch
          %540 = sbr.rel (%p538) target = $region76
        $region75: #{tpu_custom_call.1} parent=63 // pred_region
          %542 = dma.done [#allocation7], 2048
        $region76: #{tpu_custom_call.1} parent=63 // pred_fallthru
          _
        // Predicated region
        $region77: #{tpu_custom_call.1} parent=63 // pred_check
          %p543 = pneg %p190
        $region78: #{tpu_custom_call.1} parent=63 // pred_check_branch
          %545 = sbr.rel (%p543) target = $region80
        $region79: #{tpu_custom_call.1} parent=63 // pred_region
          %547 = dma.done [#allocation10], 256
        $region80: #{tpu_custom_call.1} parent=63 // pred_fallthru
          _
        // Predicated region
        $region81: #{tpu_custom_call.1} parent=63 // pred_check
          %p548 = pneg %p211
        $region82: #{tpu_custom_call.1} parent=63 // pred_check_branch
          %550 = sbr.rel (%p548) target = $region84
        $region83: #{tpu_custom_call.1} parent=63 // pred_region
          %552 = dma.done [#allocation10], 512
        $region84: #{tpu_custom_call.1} parent=63 // pred_fallthru
          _
        // Predicated region
        $region85: #{tpu_custom_call.1} parent=63 // pred_check
          %p553 = pneg %p253
        $region86: #{tpu_custom_call.1} parent=63 // pred_check_branch
          %555 = sbr.rel (%p553) target = $region88
        $region87: #{tpu_custom_call.1} parent=63 // pred_region
          %557 = dma.done [#allocation13], 2048
        $region88: #{tpu_custom_call.1} parent=63 // pred_fallthru
          _
        %p558 = pneg %p54
        %p559 = pneg %p51
        %s560 = sand.u32 %s67, 1
        %s561 = scalar_lea.sflag [#allocation4], %s560
        %s562 = sand.u32 %s67, 1
        %s563 = smul.addr %s562, 8
        %s564 = scalar_lea.vmem [#allocation3], %s563
        %p565 = pneg %p80
        %p566 = pneg %p77
        %s567 = sand.u32 %s38, 1
        %s568 = scalar_lea.sflag [#allocation7], %s567
        %s569 = sand.u32 %s93, 1
        %s570 = smul.addr %s569, 512
        %s571 = scalar_lea.vmem [#allocation6], %s570
        %p572 = pneg %p106
        %p573 = pneg %p103
        %p574 = pneg %p127
        %p575 = pneg %p124
        %p576 = pneg %p148
        %p577 = pneg %p145
        %p578 = pneg %p169
        %p579 = pneg %p166
        %p580 = pneg %p190
        %p581 = pneg %p187
        %p582 = pneg %p211
        %p583 = pneg %p208
        %p584 = pneg %p232
        %p585 = pneg %p229
        %p586 = pneg %p253
        %p587 = pneg %p250
        %p588 = pneg %p274
        %p589 = pneg %p271
        %p590 = pneg %p295
        %p591 = pneg %p292
        %p592 = pneg %p316
        %p593 = pneg %p313
        %p594 = pneg %p337
        %p595 = pneg %p334
        %p596 = pneg %p358
        %p597 = pneg %p355
        %p598 = pneg %p379
        %p599 = pneg %p376
        %s600 = smul.u32 4, %s38
        %s601 = smul.u32 64, %s38
        %p603 = scmp.eq.s32.totalorder %s38, 0
        // Predicated region
        $region89: #{tpu_custom_call.1} parent=63 // pred_check
          %p604 = pneg %p603
        $region90: #{tpu_custom_call.1} parent=63 // pred_check_branch
          %606 = sbr.rel (%p604) target = $region92
        $region91: #{tpu_custom_call.1} parent=63 // pred_region
          %607 = vst [vmem:[#allocation2] sm:$0x3] 0.0
        $region92: #{tpu_custom_call.1} parent=63 // pred_fallthru
          _
        %v608 = vld [vmem:[#allocation2] sm:$0x3]
        %v609 = vld [vmem:[%s522] sm:$0xff]
        %611 = vst [vmem:[#allocation1] ss:$4 sm:$0xff] %v609
        %v612 = vld.sshfl [vmem:[#allocation1] sm:$0xff pattern:$0x73625140]
        %v613 = vld.sshfl [vmem:[#allocation1 + $0x8] sm:$0xff pattern:$0x73625140]
        %v614 = vld.sshfl [vmem:[#allocation1 + $0x10] sm:$0xff pattern:$0x73625140]
        %v615 = vld.sshfl [vmem:[#allocation1 + $0x18] sm:$0xff pattern:$0x73625140]
        %v620 = vpack.c.bf16 %v612, %v612
        %v621 = vpack.c.bf16 %v613, %v613
        %v622 = vpack.c.bf16 %v614, %v614
        %v623 = vpack.c.bf16 %v615, %v615
        %v624 = vld [vmem:[%s532] sm:$0xff]
        %v625 = vld [vmem:[%s532 + $0x8] sm:$0xff]
        %v626 = vld [vmem:[%s532 + $0x10] sm:$0xff]
        %v627 = vld [vmem:[%s532 + $0x18] sm:$0xff]
        %v628 = vld [vmem:[%s532 + $0x20] sm:$0xff]
        %v629 = vld [vmem:[%s532 + $0x28] sm:$0xff]
        %v630 = vld [vmem:[%s532 + $0x30] sm:$0xff]
        %v631 = vld [vmem:[%s532 + $0x38] sm:$0xff]
        %v632 = vld [vmem:[%s532 + $0x40] sm:$0xff]
        %v633 = vld [vmem:[%s532 + $0x48] sm:$0xff]
        %v634 = vld [vmem:[%s532 + $0x50] sm:$0xff]
        %v635 = vld [vmem:[%s532 + $0x58] sm:$0xff]
        %v636 = vld [vmem:[%s532 + $0x60] sm:$0xff]
        %v637 = vld [vmem:[%s532 + $0x68] sm:$0xff]
        %v638 = vld [vmem:[%s532 + $0x70] sm:$0xff]
        %v639 = vld [vmem:[%s532 + $0x78] sm:$0xff]
        %v640 = vld [vmem:[%s532 + $0x80] sm:$0xff]
        %v641 = vld [vmem:[%s532 + $0x88] sm:$0xff]
        %v642 = vld [vmem:[%s532 + $0x90] sm:$0xff]
        %v643 = vld [vmem:[%s532 + $0x98] sm:$0xff]
        %v644 = vld [vmem:[%s532 + $0xa0] sm:$0xff]
        %v645 = vld [vmem:[%s532 + $0xa8] sm:$0xff]
        %v646 = vld [vmem:[%s532 + $0xb0] sm:$0xff]
        %v647 = vld [vmem:[%s532 + $0xb8] sm:$0xff]
        %v648 = vld [vmem:[%s532 + $0xc0] sm:$0xff]
        %v649 = vld [vmem:[%s532 + $0xc8] sm:$0xff]
        %v650 = vld [vmem:[%s532 + $0xd0] sm:$0xff]
        %v651 = vld [vmem:[%s532 + $0xd8] sm:$0xff]
        %v652 = vld [vmem:[%s532 + $0xe0] sm:$0xff]
        %v653 = vld [vmem:[%s532 + $0xe8] sm:$0xff]
        %v654 = vld [vmem:[%s532 + $0xf0] sm:$0xff]
        %v655 = vld [vmem:[%s532 + $0xf8] sm:$0xff]
        %v656 = vld [vmem:[%s532 + $0x100] sm:$0xff]
        %v657 = vld [vmem:[%s532 + $0x108] sm:$0xff]
        %v658 = vld [vmem:[%s532 + $0x110] sm:$0xff]
        %v659 = vld [vmem:[%s532 + $0x118] sm:$0xff]
        %v660 = vld [vmem:[%s532 + $0x120] sm:$0xff]
        %v661 = vld [vmem:[%s532 + $0x128] sm:$0xff]
        %v662 = vld [vmem:[%s532 + $0x130] sm:$0xff]
        %v663 = vld [vmem:[%s532 + $0x138] sm:$0xff]
        %v664 = vld [vmem:[%s532 + $0x140] sm:$0xff]
        %v665 = vld [vmem:[%s532 + $0x148] sm:$0xff]
        %v666 = vld [vmem:[%s532 + $0x150] sm:$0xff]
        %v667 = vld [vmem:[%s532 + $0x158] sm:$0xff]
        %v668 = vld [vmem:[%s532 + $0x160] sm:$0xff]
        %v669 = vld [vmem:[%s532 + $0x168] sm:$0xff]
        %v670 = vld [vmem:[%s532 + $0x170] sm:$0xff]
        %v671 = vld [vmem:[%s532 + $0x178] sm:$0xff]
        %v672 = vld [vmem:[%s532 + $0x180] sm:$0xff]
        %v673 = vld [vmem:[%s532 + $0x188] sm:$0xff]
        %v674 = vld [vmem:[%s532 + $0x190] sm:$0xff]
        %v675 = vld [vmem:[%s532 + $0x198] sm:$0xff]
        %v676 = vld [vmem:[%s532 + $0x1a0] sm:$0xff]
        %v677 = vld [vmem:[%s532 + $0x1a8] sm:$0xff]
        %v678 = vld [vmem:[%s532 + $0x1b0] sm:$0xff]
        %v679 = vld [vmem:[%s532 + $0x1b8] sm:$0xff]
        %v680 = vld [vmem:[%s532 + $0x1c0] sm:$0xff]
        %v681 = vld [vmem:[%s532 + $0x1c8] sm:$0xff]
        %v682 = vld [vmem:[%s532 + $0x1d0] sm:$0xff]
        %v683 = vld [vmem:[%s532 + $0x1d8] sm:$0xff]
        %v684 = vld [vmem:[%s532 + $0x1e0] sm:$0xff]
        %v685 = vld [vmem:[%s532 + $0x1e8] sm:$0xff]
        %v686 = vld [vmem:[%s532 + $0x1f0] sm:$0xff]
        %v687 = vld [vmem:[%s532 + $0x1f8] sm:$0xff]
        %v688 = vpack.c.bf16 %v625, %v624
        %v689 = vpack.c.bf16 %v627, %v626
        %v690 = vpack.c.bf16 %v629, %v628
        %v691 = vpack.c.bf16 %v631, %v630
        %v692 = vpack.c.bf16 %v633, %v632
        %v693 = vpack.c.bf16 %v635, %v634
        %v694 = vpack.c.bf16 %v637, %v636
        %v695 = vpack.c.bf16 %v639, %v638
        %v696 = vpack.c.bf16 %v641, %v640
        %v697 = vpack.c.bf16 %v643, %v642
        %v698 = vpack.c.bf16 %v645, %v644
        %v699 = vpack.c.bf16 %v647, %v646
        %v700 = vpack.c.bf16 %v649, %v648
        %v701 = vpack.c.bf16 %v651, %v650
        %v702 = vpack.c.bf16 %v653, %v652
        %v703 = vpack.c.bf16 %v655, %v654
        %v704 = vpack.c.bf16 %v657, %v656
        %v705 = vpack.c.bf16 %v659, %v658
        %v706 = vpack.c.bf16 %v661, %v660
        %v707 = vpack.c.bf16 %v663, %v662
        %v708 = vpack.c.bf16 %v665, %v664
        %v709 = vpack.c.bf16 %v667, %v666
        %v710 = vpack.c.bf16 %v669, %v668
        %v711 = vpack.c.bf16 %v671, %v670
        %v712 = vpack.c.bf16 %v673, %v672
        %v713 = vpack.c.bf16 %v675, %v674
        %v714 = vpack.c.bf16 %v677, %v676
        %v715 = vpack.c.bf16 %v679, %v678
        %v716 = vpack.c.bf16 %v681, %v680
        %v717 = vpack.c.bf16 %v683, %v682
        %v718 = vpack.c.bf16 %v685, %v684
        %v719 = vpack.c.bf16 %v687, %v686
        %720 = vmatpush.bf16.msra.mxu0 %v695
        %721 = vmatpush.bf16.msra.mxu0 %v694
        %722 = vmatpush.bf16.msra.mxu0 %v693
        %723 = vmatpush.bf16.msra.mxu0 %v692
        %724 = vmatpush.bf16.msra.mxu0 %v691
        %725 = vmatpush.bf16.msra.mxu0 %v690
        %726 = vmatpush.bf16.msra.mxu0 %v689
        %727 = vmatpush.bf16.msra.mxu0 %v688
        %728 = vmatmul.bf16.gmra.mxu0 %v620
        %v729 = vpop.f32.mrf.mxu0
        %v730 = vadd.f32 0.0, %v729
        %v731 = vpop.f32.mrf.mxu0
        %732 = vdwg.mxu0
        %733 = vmatpush.bf16.msra.mxu0 %v703
        %734 = vmatpush.bf16.msra.mxu0 %v702
        %735 = vmatpush.bf16.msra.mxu0 %v701
        %736 = vmatpush.bf16.msra.mxu0 %v700
        %737 = vmatpush.bf16.msra.mxu0 %v699
        %738 = vmatpush.bf16.msra.mxu0 %v698
        %739 = vmatpush.bf16.msra.mxu0 %v697
        %740 = vmatpush.bf16.msra.mxu0 %v696
        %741 = vmatmul.bf16.gmra.mxu0 %v621
        %v742 = vpop.f32.mrf.mxu0
        %v743 = vadd.f32 %v730, %v742
        %v744 = vpop.f32.mrf.mxu0
        %745 = vdwg.mxu0
        %746 = vmatpush.bf16.msra.mxu0 %v711
        %747 = vmatpush.bf16.msra.mxu0 %v710
        %748 = vmatpush.bf16.msra.mxu0 %v709
        %749 = vmatpush.bf16.msra.mxu0 %v708
        %750 = vmatpush.bf16.msra.mxu0 %v707
        %751 = vmatpush.bf16.msra.mxu0 %v706
        %752 = vmatpush.bf16.msra.mxu0 %v705
        %753 = vmatpush.bf16.msra.mxu0 %v704
        %754 = vmatmul.bf16.gmra.mxu0 %v622
        %v755 = vpop.f32.mrf.mxu0
        %v756 = vadd.f32 %v743, %v755
        %v757 = vpop.f32.mrf.mxu0
        %758 = vdwg.mxu0
        %759 = vmatpush.bf16.msra.mxu0 %v719
        %760 = vmatpush.bf16.msra.mxu0 %v718
        %761 = vmatpush.bf16.msra.mxu0 %v717
        %762 = vmatpush.bf16.msra.mxu0 %v716
        %763 = vmatpush.bf16.msra.mxu0 %v715
        %764 = vmatpush.bf16.msra.mxu0 %v714
        %765 = vmatpush.bf16.msra.mxu0 %v713
        %766 = vmatpush.bf16.msra.mxu0 %v712
        %767 = vmatmul.bf16.gmra.mxu0 %v623
        %v768 = vpop.f32.mrf.mxu0
        %v769 = vadd.f32 %v756, %v768
        %v770 = vpop.f32.mrf.mxu0
        %771 = vdwg.mxu0
        %v772 = vadd.f32 %v608, %v769
        %773 = vst [vmem:[#allocation2] sm:$0x3] %v772
        %p774 = scmp.eq.s32.totalorder %s38, 1
        // Predicated region
        $region93: #{tpu_custom_call.1} parent=63 // pred_check
          %p775 = pneg %p774
        $region94: #{tpu_custom_call.1} parent=63 // pred_check_branch
          %777 = sbr.rel (%p775) target = $region96
        $region95: #{tpu_custom_call.1} parent=63 // pred_region
          %v778 = vld [vmem:[#allocation2] sm:$0x3]
          %v779 = vld [vmem:[%s3] sm:$0x1]
          %v781 = vperm.slane %v779, 0
          %v783 = vadd.f32 %v778, %v781
          %784 = vst [vmem:[#allocation18] sm:$0x3] %v783
          %v785 = vpack.c.bf16 %v783, %v783
          %v786 = vld [vmem:[#allocation8] sm:$0xff]
          %v787 = vld [vmem:[#allocation8 + $0x8] sm:$0xff]
          %v788 = vld [vmem:[#allocation8 + $0x10] sm:$0xff]
          %v789 = vld [vmem:[#allocation8 + $0x18] sm:$0xff]
          %v790 = vld [vmem:[#allocation8 + $0x20] sm:$0xff]
          %v791 = vld [vmem:[#allocation8 + $0x28] sm:$0xff]
          %v792 = vld [vmem:[#allocation8 + $0x30] sm:$0xff]
          %v793 = vld [vmem:[#allocation8 + $0x38] sm:$0xff]
          %v794 = vld [vmem:[#allocation8 + $0x40] sm:$0xff]
          %v795 = vld [vmem:[#allocation8 + $0x48] sm:$0xff]
          %v796 = vld [vmem:[#allocation8 + $0x50] sm:$0xff]
          %v797 = vld [vmem:[#allocation8 + $0x58] sm:$0xff]
          %v798 = vld [vmem:[#allocation8 + $0x60] sm:$0xff]
          %v799 = vld [vmem:[#allocation8 + $0x68] sm:$0xff]
          %v800 = vld [vmem:[#allocation8 + $0x70] sm:$0xff]
          %v801 = vld [vmem:[#allocation8 + $0x78] sm:$0xff]
          %v802 = vpack.c.bf16 %v787, %v786
          %v803 = vpack.c.bf16 %v789, %v788
          %v804 = vpack.c.bf16 %v791, %v790
          %v805 = vpack.c.bf16 %v793, %v792
          %v806 = vpack.c.bf16 %v795, %v794
          %v807 = vpack.c.bf16 %v797, %v796
          %v808 = vpack.c.bf16 %v799, %v798
          %v809 = vpack.c.bf16 %v801, %v800
          %v810 = vld [vmem:[%s5] sm:$0x1]
          %v812 = vperm.slane %v810, 0
          %814 = vmatpush.bf16.msra.mxu0 %v809
          %815 = vmatpush.bf16.msra.mxu0 %v808
          %816 = vmatpush.bf16.msra.mxu0 %v807
          %817 = vmatpush.bf16.msra.mxu0 %v806
          %818 = vmatpush.bf16.msra.mxu0 %v805
          %819 = vmatpush.bf16.msra.mxu0 %v804
          %820 = vmatpush.bf16.msra.mxu0 %v803
          %821 = vmatpush.bf16.msra.mxu0 %v802
          %822 = vmatmul.bf16.gmra.mxu0 %v785
          %v823 = vpop.f32.mrf.mxu0
          %v824 = vadd.f32 %v812, %v823
          %v825 = vpop.f32.mrf.mxu0
          %826 = vdwg.mxu0
          %827 = vst [vmem:[#allocation17] sm:$0x3] %v824
          %v828 = vmul.f32 %v783, %v783
          %vm829 = vcmask 1041408
          %v830 = vsel %vm829, %v828, 0.0
          %831 = vadd.xlane.f32.xlu0 %v830
          %v832 = vpop.xlane.xlu0 %831
          %v833 = vadd.f32 %v832, 1e-12
          %v834 = vrsqrt.pop %v833
          %v835 = vmul.f32 %v834, %v833
          %v836 = vmul.f32 %v835, %v834
          %v837 = vmul.f32 0.5, %v836
          %v838 = vsub.f32 1.5, %v837
          %v839 = vmul.f32 %v834, %v838
          %vm840 = vweird.f32 %v833
          %vm841 = vweird.f32 %v834
          %vm842 = vmor %vm840, %vm841
          %v843 = vsel %vm842, %v834, %v839
          %v844 = vmul.f32 %v783, %v843
          %v845 = vlaneseq
          %v846 = vand.u32 %v845, 127
          %v847 = vld [vmem:[%s0] sm:$0x3]
          %848 = vset.pattern.permute.xlu0 0
          %849 = vperm.xlu0 %848, %v847
          %v850 = vpop.permute.xlu0 %849
          %vm851 = vcmp.eq.s32.totalorder %v846, %v850
          %v852 = vsel %vm851, 1, 0
          %v853 = vcvt.s32.f32 %v852
          %v854 = vld [vmem:[#allocation9] sm:$0xff]
          %v855 = vld [vmem:[#allocation9 + $0x8] sm:$0xff]
          %vm856 = vcmask 130048
          %v858 = vsel %vm856, %v853, 0
          %860 = vmatpush.msra.mxu0 0.0
          %861 = vmatpush.msra.mxu0 0.0
          %862 = vmatpush.msra.mxu0 0.0
          %863 = vmatpush.msra.mxu0 0.0
          %864 = vmatpush.msra.mxu0 0.0
          %865 = vmatpush.msra.mxu0 0.0
          %866 = vmatpush.msra.mxu0 0.0
          %867 = vmatpush.msra.mxu0 0.0
          %868 = vmatpush.msra.mxu0 0.0
          %869 = vmatpush.msra.mxu0 0.0
          %870 = vmatpush.msra.mxu0 0.0
          %871 = vmatpush.msra.mxu0 0.0
          %872 = vmatpush.msra.mxu0 0.0
          %873 = vmatpush.msra.mxu0 0.0
          %874 = vmatpush.msra.mxu0 %v855
          %875 = vmatpush.msra.mxu0 %v854
          %876 = vmatmul.f32.gmra.mxu0 %v858
          %v877 = vpop.f32.mrf.mxu0
          %v878 = vadd.f32 0.0, %v877
          %879 = vdwg.mxu0
          %v880 = vpack.c.bf16 %v878, %v878
          %v881 = vld [vmem:[#allocation11] sm:$0xff]
          %v882 = vld [vmem:[#allocation11 + $0x8] sm:$0xff]
          %v883 = vld [vmem:[#allocation11 + $0x10] sm:$0xff]
          %v884 = vld [vmem:[#allocation11 + $0x18] sm:$0xff]
          %v885 = vpack.c.bf16 %v882, %v881
          %v886 = vpack.c.bf16 %v884, %v883
          %v887 = vld [vmem:[%s8] sm:$0x1]
          %v889 = vperm.slane %v887, 0
          %vm891 = vcmask 261120
          %v893 = vsel %vm891, %v880, 0
          %895 = vmatpush.bf16.msra.mxu0 0
          %896 = vmatpush.bf16.msra.mxu0 0
          %897 = vmatpush.bf16.msra.mxu0 0
          %898 = vmatpush.bf16.msra.mxu0 0
          %899 = vmatpush.bf16.msra.mxu0 0
          %900 = vmatpush.bf16.msra.mxu0 0
          %901 = vmatpush.bf16.msra.mxu0 %v886
          %902 = vmatpush.bf16.msra.mxu0 %v885
          %903 = vmatmul.bf16.gmra.mxu0 %v893
          %v904 = vpop.f32.mrf.mxu0
          %v905 = vadd.f32 %v889, %v904
          %v906 = vpop.f32.mrf.mxu0
          %907 = vdwg.mxu0
          %908 = vst [vmem:[#allocation20] sm:$0x3] %v905
          %v909 = vmul.f32 %v905, 0.5
          %v910 = vadd.f32 %v844, %v909
          %911 = vst [vmem:[#allocation14] sm:$0x3] %v910
          %v912 = vpack.c.bf16 %v910, %v910
          %v913 = vld [vmem:[#allocation12] sm:$0xff]
          %v914 = vld [vmem:[#allocation12 + $0x8] sm:$0xff]
          %v915 = vld [vmem:[#allocation12 + $0x10] sm:$0xff]
          %v916 = vld [vmem:[#allocation12 + $0x18] sm:$0xff]
          %v917 = vld [vmem:[#allocation12 + $0x20] sm:$0xff]
          %v918 = vld [vmem:[#allocation12 + $0x28] sm:$0xff]
          %v919 = vld [vmem:[#allocation12 + $0x30] sm:$0xff]
          %v920 = vld [vmem:[#allocation12 + $0x38] sm:$0xff]
          %v921 = vld [vmem:[#allocation12 + $0x40] sm:$0xff]
          %v922 = vld [vmem:[#allocation12 + $0x48] sm:$0xff]
          %v923 = vld [vmem:[#allocation12 + $0x50] sm:$0xff]
          %v924 = vld [vmem:[#allocation12 + $0x58] sm:$0xff]
          %v925 = vld [vmem:[#allocation12 + $0x60] sm:$0xff]
          %v926 = vld [vmem:[#allocation12 + $0x68] sm:$0xff]
          %v927 = vld [vmem:[#allocation12 + $0x70] sm:$0xff]
          %v928 = vld [vmem:[#allocation12 + $0x78] sm:$0xff]
          %v929 = vpack.c.bf16 %v914, %v913
          %v930 = vpack.c.bf16 %v916, %v915
          %v931 = vpack.c.bf16 %v918, %v917
          %v932 = vpack.c.bf16 %v920, %v919
          %v933 = vpack.c.bf16 %v922, %v921
          %v934 = vpack.c.bf16 %v924, %v923
          %v935 = vpack.c.bf16 %v926, %v925
          %v936 = vpack.c.bf16 %v928, %v927
          %v937 = vld [vmem:[%s10] sm:$0x1]
          %v939 = vperm.slane %v937, 0
          %941 = vmatpush.bf16.msra.mxu0 %v936
          %942 = vmatpush.bf16.msra.mxu0 %v935
          %943 = vmatpush.bf16.msra.mxu0 %v934
          %944 = vmatpush.bf16.msra.mxu0 %v933
          %945 = vmatpush.bf16.msra.mxu0 %v932
          %946 = vmatpush.bf16.msra.mxu0 %v931
          %947 = vmatpush.bf16.msra.mxu0 %v930
          %948 = vmatpush.bf16.msra.mxu0 %v929
          %949 = vmatmul.bf16.gmra.mxu0 %v912
          %v950 = vpop.f32.mrf.mxu0
          %v951 = vadd.f32 %v939, %v950
          %v952 = vpop.f32.mrf.mxu0
          %953 = vdwg.mxu0
          %954 = vst [vmem:[#allocation15] sm:$0x3] %v951
        $region96: #{tpu_custom_call.1} parent=63 // pred_fallthru
          _
        // Predicated region
        $region97: #{tpu_custom_call.1} parent=63 // pred_check
          %p955 = pneg %p292
        $region98: #{tpu_custom_call.1} parent=63 // pred_check_branch
          %957 = sbr.rel (%p955) target = $region100
        $region99: #{tpu_custom_call.1} parent=63 // pred_region
          %959 = vsyncadd [#allocation5], 0
          %s961 = sshll.u32 [#allocation14], 4
          %s962 = int_to_ptr.vmem [resolvable:$true] %s961
          %s963 = sshll.u32 %s11, 4
          %s964 = int_to_ptr.hbm [resolvable:$true] %s963
          %966 = dma.vmem_to_hbm [thread:$0]  %s962, 32, %s964, [#allocation5]
        $region100: #{tpu_custom_call.1} parent=63 // pred_fallthru
          _
        // Predicated region
        $region101: #{tpu_custom_call.1} parent=63 // pred_check
          %p967 = pneg %p313
        $region102: #{tpu_custom_call.1} parent=63 // pred_check_branch
          %969 = sbr.rel (%p967) target = $region104
        $region103: #{tpu_custom_call.1} parent=63 // pred_region
          %971 = vsyncadd [#allocation16], 0
          %s973 = sshll.u32 [#allocation15], 4
          %s974 = int_to_ptr.vmem [resolvable:$true] %s973
          %s975 = sshll.u32 %s12, 4
          %s976 = int_to_ptr.hbm [resolvable:$true] %s975
          %978 = dma.vmem_to_hbm [thread:$0]  %s974, 32, %s976, [#allocation16]
        $region104: #{tpu_custom_call.1} parent=63 // pred_fallthru
          _
        // Predicated region
        $region105: #{tpu_custom_call.1} parent=63 // pred_check
          %p979 = pneg %p334
        $region106: #{tpu_custom_call.1} parent=63 // pred_check_branch
          %981 = sbr.rel (%p979) target = $region108
        $region107: #{tpu_custom_call.1} parent=63 // pred_region
          %983 = vsyncadd [#allocation16], 0
          %s985 = sshll.u32 [#allocation17], 4
          %s986 = int_to_ptr.vmem [resolvable:$true] %s985
          %s987 = sshll.u32 %s13, 4
          %s988 = int_to_ptr.hbm [resolvable:$true] %s987
          %990 = dma.vmem_to_hbm [thread:$0]  %s986, 32, %s988, [#allocation16]
        $region108: #{tpu_custom_call.1} parent=63 // pred_fallthru
          _
        // Predicated region
        $region109: #{tpu_custom_call.1} parent=63 // pred_check
          %p991 = pneg %p355
        $region110: #{tpu_custom_call.1} parent=63 // pred_check_branch
          %993 = sbr.rel (%p991) target = $region112
        $region111: #{tpu_custom_call.1} parent=63 // pred_region
          %995 = vsyncadd [#allocation19], 0
          %s997 = sshll.u32 [#allocation18], 4
          %s998 = int_to_ptr.vmem [resolvable:$true] %s997
          %s999 = sshll.u32 %s14, 4
          %s1000 = int_to_ptr.hbm [resolvable:$true] %s999
          %1002 = dma.vmem_to_hbm [thread:$0]  %s998, 32, %s1000, [#allocation19]
        $region112: #{tpu_custom_call.1} parent=63 // pred_fallthru
          _
        // Predicated region
        $region113: #{tpu_custom_call.1} parent=63 // pred_check
          %p1003 = pneg %p376
        $region114: #{tpu_custom_call.1} parent=63 // pred_check_branch
          %1005 = sbr.rel (%p1003) target = $region116
        $region115: #{tpu_custom_call.1} parent=63 // pred_region
          %1007 = vsyncadd [#allocation19], 0
          %s1009 = sshll.u32 [#allocation20], 4
          %s1010 = int_to_ptr.vmem [resolvable:$true] %s1009
          %s1011 = sshll.u32 %s15, 4
          %s1012 = int_to_ptr.hbm [resolvable:$true] %s1011
          %1014 = dma.vmem_to_hbm [thread:$0]  %s1010, 32, %s1012, [#allocation19]
        $region116: #{tpu_custom_call.1} parent=63 // pred_fallthru
          _
        // Predicated region
        $region117: #{tpu_custom_call.1} parent=63 // pred_check
          %p1015 = pneg %p292
        $region118: #{tpu_custom_call.1} parent=63 // pred_check_branch
          %1017 = sbr.rel (%p1015) target = $region120
        $region119: #{tpu_custom_call.1} parent=63 // pred_region
          %1019 = dma.done [#allocation5], 32
        $region120: #{tpu_custom_call.1} parent=63 // pred_fallthru
          _
        // Predicated region
        $region121: #{tpu_custom_call.1} parent=63 // pred_check
          %p1020 = pneg %p313
        $region122: #{tpu_custom_call.1} parent=63 // pred_check_branch
          %1022 = sbr.rel (%p1020) target = $region124
        $region123: #{tpu_custom_call.1} parent=63 // pred_region
          %1024 = dma.done [#allocation16], 32
        $region124: #{tpu_custom_call.1} parent=63 // pred_fallthru
          _
        // Predicated region
        $region125: #{tpu_custom_call.1} parent=63 // pred_check
          %p1025 = pneg %p334
        $region126: #{tpu_custom_call.1} parent=63 // pred_check_branch
          %1027 = sbr.rel (%p1025) target = $region128
        $region127: #{tpu_custom_call.1} parent=63 // pred_region
          %1029 = dma.done [#allocation16], 32
        $region128: #{tpu_custom_call.1} parent=63 // pred_fallthru
          _
        // Predicated region
        $region129: #{tpu_custom_call.1} parent=63 // pred_check
          %p1030 = pneg %p355
        $region130: #{tpu_custom_call.1} parent=63 // pred_check_branch
          %1032 = sbr.rel (%p1030) target = $region132
        $region131: #{tpu_custom_call.1} parent=63 // pred_region
          %1034 = dma.done [#allocation19], 32
        $region132: #{tpu_custom_call.1} parent=63 // pred_fallthru
          _
        // Predicated region
        $region133: #{tpu_custom_call.1} parent=63 // pred_check
          %p1035 = pneg %p376
        $region134: #{tpu_custom_call.1} parent=63 // pred_check_branch
          %1037 = sbr.rel (%p1035) target = $region136
        $region135: #{tpu_custom_call.1} parent=63 // pred_region
          %1039 = dma.done [#allocation19], 32
        $region136: #{tpu_custom_call.1} parent=63 // pred_fallthru
          _
      $region64: #{tpu_custom_call.1} parent=5 // pred_fallthru
        _
      %p1040 = scmp.le.s32.totalorder 2, %s33
      // Predicated region
      $region137: #{tpu_custom_call.1} parent=5 // pred_check
        %p1041 = pneg %p1040
      $region138: #{tpu_custom_call.1} parent=5 // pred_check_branch
        %1043 = sbr.rel (%p1041) target = $region140
      $region139: #{tpu_custom_call.1} parent=5 // pred_region
        %s1044 = ssub.s32 %s33, 2
      $region140: #{tpu_custom_call.1} parent=5 // pred_fallthru
        _
    $region6: #{tpu_custom_call.1} parent=1 // loop_footer
      %s37 = sadd.s32 1, %s33
    $region7: #{tpu_custom_call.1} parent=1 // loop_footer_branch
      %32 = sbr.rel target = $region3
    $region8: #{tpu_custom_call.1} parent=1 // loop_exit
      _
    %1045 = vsyncpa [#allocation4], 1
    %s1046 = scalar_lea.sflag [#allocation4], 1
    %1047 = vsyncpa %s1046, 1
    %1048 = vsyncpa [#allocation7], 1
    %s1049 = scalar_lea.sflag [#allocation7], 1
    %1050 = vsyncpa %s1049, 1
    %1051 = vsyncpa [#allocation10], 1
    %1052 = vsyncpa [#allocation13], 1
    %1053 = vsyncpa [#allocation5], 1
    %s1054 = scalar_lea.sflag [#allocation5], 1
    %1055 = vsyncpa %s1054, 1
    %1056 = vsyncpa [#allocation16], 1
    %1057 = vsyncpa [#allocation19], 1

</llo_original>
